<compile_context>
chip_gen: v7x
topology: tpu7x:2x2x1
jax: 0.10.0
libtpu: 0.0.40
codegen_flags: <defaults>
</compile_context>

<pallas_src>
import jax
import jax.numpy as jnp
from jax.experimental import pallas as pl
from jax.experimental.pallas import tpu as pltpu

C_IN, C_OUT = 3, 128
H_IN, W_IN = 6, 7
KH, KW = 4, 4
PAD = 1
H_OUT = H_IN + 2 * PAD - KH + 1   # 5
W_OUT = W_IN + 2 * PAD - KW + 1   # 6
K_DIM = C_IN * KH * KW            # 48
BN_EPS = 1e-5
LANE = 128
TILE_M_MAX = 8192                 # im2col rows (lane dim) per grid step
SPLIT_THRESHOLD = 4096            # above this, force >=2 grid steps (v7x megacore)


def _round_up(x, m):
    return (x + m - 1) // m * m


def _conv_bn_relu_kernel(patches_ref, w_ref, bias_ref, o_ref):
    # patches_ref: (K_DIM, tile_m) bf16   w_ref: (C_OUT, K_DIM) bf16 (BN folded)
    # bias_ref:    (C_OUT, 1) f32         o_ref: (C_OUT, tile_m) bf16
    acc = jnp.dot(w_ref[...], patches_ref[...],
                  preferred_element_type=jnp.float32)            # MXU, f32 acc
    o_ref[...] = jnp.maximum(acc + bias_ref[...], 0.0).astype(o_ref.dtype)


def conv_block_forward(x, conv_w, conv_b, bn_gamma, bn_beta, bn_mean, bn_var):
    """ConvBlock forward.  x: (..., 3, 6, 7) f32 -> (N, 128, 5, 6) bfloat16.

    BatchNorm uses inference (running) statistics.  Output is bf16 (per perf
    review: halves the dominant HBM stream and the final NCHW permute);
    numerically within ~1e-2 of the f32 PyTorch ConvBlock.
    """
    x = x.reshape(-1, C_IN, H_IN, W_IN)
    n = x.shape[0]
    m = n * H_OUT * W_OUT

    # ---- glue: im2col, laid out (K, M) so the kernel's matmul output is
    # already channel-major (no in-kernel transpose, cheap NCHW permute). ----
    xp = jnp.pad(x, ((0, 0), (0, 0), (PAD, PAD), (PAD, PAD)))
    cols = []
    for kh in range(KH):
        for kw in range(KW):
            cols.append(xp[:, :, kh:kh + H_OUT, kw:kw + W_OUT])   # (N, C, Ho, Wo)
    pat = jnp.stack(cols, axis=0).reshape(KH, KW, n, C_IN, H_OUT, W_OUT)
    pat = jnp.transpose(pat, (3, 0, 1, 2, 4, 5))          # (C, KH, KW, N, Ho, Wo)
    patches = pat.reshape(K_DIM, m).astype(jnp.bfloat16)  # bf16: halve HBM bytes

    # ---- glue: fold conv bias + BN (inference stats) into weights / bias ----
    inv_std = 1.0 / jnp.sqrt(bn_var + BN_EPS)
    scale = (bn_gamma * inv_std).astype(jnp.float32)                   # (C_OUT,)
    w_mat = conv_w.reshape(C_OUT, K_DIM).astype(jnp.float32) * scale[:, None]
    w_mat = w_mat.astype(jnp.bfloat16)                                 # (C_OUT, K)
    bias = ((conv_b - bn_mean) * scale + bn_beta).reshape(C_OUT, 1)
    bias = bias.astype(jnp.float32)

    # ---- tile M (the lane dim): 128-aligned, lane-dense, big tiles to
    # amortize ~0.35us/step; >=2 steps when M is large so both v7x TCs run. ----
    m_aligned = _round_up(m, LANE)
    if m_aligned <= SPLIT_THRESHOLD:
        n_tiles = 1
        tile_m = m_aligned
    else:
        n_tiles = max(2, -(-m_aligned // TILE_M_MAX))
        tile_m = _round_up(-(-m_aligned // n_tiles), LANE)
    m_pad = n_tiles * tile_m
    if m_pad != m:
        patches = jnp.pad(patches, ((0, 0), (0, m_pad - m)))

    # ---- Pallas kernel: (C_OUT,K)@(K,tile_m) + bias + ReLU, pipelined over M ----
    out_cm = pl.pallas_call(
        _conv_bn_relu_kernel,
        out_shape=jax.ShapeDtypeStruct((C_OUT, m_pad), jnp.bfloat16),
        grid=(n_tiles,),
        in_specs=[
            pl.BlockSpec((K_DIM, tile_m), lambda i: (0, i)),
            pl.BlockSpec((C_OUT, K_DIM), lambda i: (0, 0)),    # resident
            pl.BlockSpec((C_OUT, 1), lambda i: (0, 0)),        # resident
        ],
        out_specs=pl.BlockSpec((C_OUT, tile_m), lambda i: (0, i)),
        compiler_params=pltpu.CompilerParams(
            dimension_semantics=("parallel",),           # shard M on v7x's 2 TCs
            allow_input_fusion=[True, False, False],     # fuse im2col producer
            vmem_limit_bytes=40 * 1024 * 1024,           # headroom for 8192 tiles
        ),
    )(patches, w_mat, bias)

    # Padded M columns hold ReLU(bias) != 0; the [:, :m] slice drops them.
    out = out_cm[:, :m].reshape(C_OUT, n, H_OUT, W_OUT)
    # channel-major -> NCHW: leading-dim permute, contiguous 30-element rows.
    return jnp.transpose(out, (1, 0, 2, 3))


if __name__ == "__main__":
    key = jax.random.PRNGKey(0)
    kx, kw_, kb, kg, kbe, km, kv = jax.random.split(key, 7)

    batch = 2
    x = jax.random.normal(kx, (batch, C_IN, H_IN, W_IN), dtype=jnp.float32)

    # deterministic synthetic parameters (shapes from nn.Conv2d / nn.BatchNorm2d)
    conv_w = 0.1 * jax.random.normal(kw_, (C_OUT, C_IN, KH, KW), dtype=jnp.float32)
    conv_b = 0.1 * jax.random.normal(kb, (C_OUT,), dtype=jnp.float32)
    bn_gamma = 1.0 + 0.05 * jax.random.normal(kg, (C_OUT,), dtype=jnp.float32)
    bn_beta = 0.05 * jax.random.normal(kbe, (C_OUT,), dtype=jnp.float32)
    bn_mean = 0.05 * jax.random.normal(km, (C_OUT,), dtype=jnp.float32)
    bn_var = jnp.abs(1.0 + 0.05 * jax.random.normal(kv, (C_OUT,), dtype=jnp.float32))

    fwd = jax.jit(conv_block_forward)
    out = jax.block_until_ready(
        fwd(x, conv_w, conv_b, bn_gamma, bn_beta, bn_mean, bn_var))
    assert out.shape == (batch, C_OUT, H_OUT, W_OUT), out.shape
    assert out.dtype == jnp.bfloat16, out.dtype

    # pure-JAX f32 reference (bf16 matmul inputs/output => loosened tolerance;
    # K=48 with O(1) activations keeps the error well inside 2e-2)
    ref = jax.lax.conv_general_dilated(
        x, conv_w, window_strides=(1, 1), padding=((PAD, PAD), (PAD, PAD)),
        dimension_numbers=("NCHW", "OIHW", "NCHW"))
    ref = ref + conv_b[None, :, None, None]
    ref = (ref - bn_mean[None, :, None, None]) / jnp.sqrt(
        bn_var[None, :, None, None] + BN_EPS)
    ref = ref * bn_gamma[None, :, None, None] + bn_beta[None, :, None, None]
    ref = jnp.maximum(ref, 0.0)
    err = jnp.max(jnp.abs(out.astype(jnp.float32) - ref))
    assert jnp.allclose(out.astype(jnp.float32), ref, atol=2e-2, rtol=2e-2), float(err)

    print("KERNEL_OK")
</pallas_src>

<mosaic_0001>
module attributes {stable_mosaic.version = 11 : i64} {
  func.func @_conv_bn_relu_kernel(%arg0: i32, %arg1: memref<48x128xbf16, #tpu.memory_space<vmem>>, %arg2: memref<128x48xbf16, #tpu.memory_space<vmem>>, %arg3: memref<128x1xf32, #tpu.memory_space<vmem>>, %arg4: memref<128x128xbf16, #tpu.memory_space<vmem>>) attributes {dimension_semantics = [#tpu.dimension_semantics<parallel>], iteration_bounds = array<i64: 1>, scalar_prefetch = 0 : i64, scratch_operands = 0 : i64, tpu.core_type = #tpu.core_type<tc>, window_params = [{transform_indices = @transform_0, window_bounds = array<i64: 48, 128>}, {pipeline_mode = #tpu.pipeline_mode<synchronous>, transform_indices = @transform_1, window_bounds = array<i64: 128, 48>}, {pipeline_mode = #tpu.pipeline_mode<synchronous>, transform_indices = @transform_2, window_bounds = array<i64: 128, 1>}, {transform_indices = @transform_3, window_bounds = array<i64: 128, 128>}]} {
    %c0 = arith.constant 0 : index
    %c0_0 = arith.constant 0 : index
    %0 = vector.load %arg2[%c0, %c0_0] : memref<128x48xbf16, #tpu.memory_space<vmem>>, vector<128x48xbf16>
    %c0_1 = arith.constant 0 : index
    %c0_2 = arith.constant 0 : index
    %1 = vector.load %arg1[%c0_1, %c0_2] : memref<48x128xbf16, #tpu.memory_space<vmem>>, vector<48x128xbf16>
    %cst = arith.constant dense<0.000000e+00> : vector<128x128xf32>
    %2 = tpu.matmul %0, %1, %cst {dimension_numbers = #tpu.dot_dimension_numbers<[1], [0], [0], [1], [0, 0, 1, 1], [], []>} : vector<128x48xbf16>, vector<48x128xbf16>, vector<128x128xf32> -> vector<128x128xf32>
    %c0_3 = arith.constant 0 : index
    %c0_4 = arith.constant 0 : index
    %3 = vector.load %arg3[%c0_3, %c0_4] : memref<128x1xf32, #tpu.memory_space<vmem>>, vector<128x1xf32>
    %4 = vector.broadcast %3 : vector<128x1xf32> to vector<128x128xf32>
    %5 = arith.addf %2, %4 : vector<128x128xf32>
    %cst_5 = arith.constant 0.000000e+00 : f32
    %6 = vector.broadcast %cst_5 : f32 to vector<128x128xf32>
    %7 = arith.maximumf %5, %6 : vector<128x128xf32>
    %8 = arith.truncf %7 : vector<128x128xf32> to vector<128x128xbf16>
    %c0_6 = arith.constant 0 : index
    %c0_7 = arith.constant 0 : index
    %9 = vector.load %arg4[%c0_6, %c0_7] : memref<128x128xbf16, #tpu.memory_space<vmem>>, vector<128x128xbf16>
    tpu.vector_store %arg4[%c0_6, %c0_7], %8 {strides = array<i32>} : memref<128x128xbf16, #tpu.memory_space<vmem>>, vector<128x128xbf16>,
    return
  }
  func.func @transform_0(%arg0: i32) -> (i32, i32) {
    %c0_i32 = arith.constant 0 : i32
    %c0_i32_0 = arith.constant 0 : i32
    return %c0_i32, %arg0 : i32, i32
  }
  func.func @transform_1(%arg0: i32) -> (i32, i32) {
    %c0_i32 = arith.constant 0 : i32
    %c0_i32_0 = arith.constant 0 : i32
    %c0_i32_1 = arith.constant 0 : i32
    return %c0_i32, %c0_i32_0 : i32, i32
  }
  func.func @transform_2(%arg0: i32) -> (i32, i32) {
    %c0_i32 = arith.constant 0 : i32
    %c0_i32_0 = arith.constant 0 : i32
    %c0_i32_1 = arith.constant 0 : i32
    return %c0_i32, %c0_i32_0 : i32, i32
  }
  func.func @transform_3(%arg0: i32) -> (i32, i32) {
    %c0_i32 = arith.constant 0 : i32
    %c0_i32_0 = arith.constant 0 : i32
    return %c0_i32, %arg0 : i32, i32
  }
}

</mosaic_0001>

<llo_original>
// kernel: conv_block_forward.2
$region0: #{conv_block_forward.2}
  #allocation0 [shape = 'u32[]', space=smem, size = 0x4, offset = 0x4, fixed_abs, tag = 'smem constant byte address 0x4 - core index']
  #allocation1 [shape = 'u32[144,128]{1,0:T(1,128)}', space=vmem, size = 0x12000, scoped, tag = 'internal scratch']
  #allocation2 [shape = 'u32[2048]{0}', space=vmem, size = 0x2000, scoped, tag = 'scoped memory for conv_block_forward.2']
  #allocation3 [shape = 'u32[2048]{0}', space=vmem, size = 0x2000, scoped, tag = 'scoped memory for conv_block_forward.2']
  #allocation4 [shape = 'u32[2048]{0}', space=vmem, size = 0x2000, scoped, tag = 'scoped memory for conv_block_forward.2']
  #allocation5 [shape = 'u32[2048]{0}', space=vmem, size = 0x2000, scoped, tag = 'scoped memory for conv_block_forward.2']
  #allocation6 [shape = 'u32[2048]{0}', space=vmem, size = 0x2000, scoped, tag = 'scoped memory for conv_block_forward.2']
  %s0 = inlined_call_operand.vmem [shape: bf16[128,48], index: 0, kind: input, shape index: {}]
  %s1 = inlined_call_operand.vmem [shape: f32[128,1], index: 1, kind: input, shape index: {}]
  %s2 = inlined_call_operand.vmem [shape: bf16[48,60], index: 2, kind: input, shape index: {}]
  %s3 = inlined_call_operand.<no memory space> [shape: bf16[], index: 3, kind: input, shape index: {}]
  %s4 = inlined_call_operand.vmem [shape: bf16[128,128], index: 4, kind: output, shape index: {}]
  %s5 = sld [smem:[#allocation0]]
  $region22: #{conv_block_forward.2} parent=0
    _
  %s7 = ssub.s32 1, %s5
  %s8 = scalar_select 0, %s7, %s5
  %v9 = vstv %s3
  %v10 = vunpack.i.l.bf16 %v9
  %v12 = vunpack.i.h.bf16 %v9
  $region1: #{conv_block_forward.2} parent=0
    #allocation7 [shape = 'u8[12288]{0}', space=vmem, size = 0x3000, dematerialized = true, scoped, tag = 'FusionAdapter Buffer %fusion.1 = bf16[48,128]{1,0:T(8,128)(2,1)} fusion(%param_2.1, %param_3), kind=kLoop, calls=%fused_computation.3.clone, metadata={op_name="jit(conv_block_forward)/jit(_pad)/pad" stack_frame_id=22}']
    // Predicated region
    $region2: #{conv_block_forward.2} parent=1 // pred_check
      _
    $region3: #{conv_block_forward.2} parent=1 // pred_check_branch
      %15 = sbr.rel (0) target = $region5
    $region4: #{conv_block_forward.2} parent=1 // pred_region
      _
    $region5: #{conv_block_forward.2} parent=1 // pred_fallthru
      _
    // Predicated region
    $region6: #{conv_block_forward.2} parent=1 // pred_check
      _
    $region7: #{conv_block_forward.2} parent=1 // pred_check_branch
      %17 = sbr.rel (0) target = $region9
    $region8: #{conv_block_forward.2} parent=1 // pred_region
      _
    $region9: #{conv_block_forward.2} parent=1 // pred_fallthru
      _
    // Predicated region
    $region10: #{conv_block_forward.2} parent=1 // pred_check
      _
    $region11: #{conv_block_forward.2} parent=1 // pred_check_branch
      %19 = sbr.rel (0) target = $region13
    $region12: #{conv_block_forward.2} parent=1 // pred_region
      _
    $region13: #{conv_block_forward.2} parent=1 // pred_fallthru
      _
    %s21 = sor.u32 255, 127
    %s22 = sand.u32 %s21, 85
    %s23 = sshrl.u32 %s22, 1
    %s24 = sor.u32 %s22, %s23
    %s25 = sand.u32 51, %s24
    %s26 = sshrl.u32 %s25, 2
    %s27 = sor.u32 %s25, %s26
    %s28 = sand.u32 15, %s27
    %v29 = vld [vmem:[%s2] sm:%s28]
    %v30 = vunpack.c.l.bf16 %v29
    %v31 = vunpack.c.h.bf16 %v29
    %v32 = vlaneseq
    %v33 = vand.u32 %v32, 127
    %vm35 = vcmp.lt.s32.totalorder %v33, 60
    %v36 = vsel %vm35, %v30, %v10
    %v37 = vpack.c.bf16 0.0, %v36
    %39 = vst [vmem:[#allocation7] sm:$0xf] %v37
    %s40 = scalar_lea.vmem %s2, 4
    %s42 = sor.u32 255, 127
    %s43 = sand.u32 %s42, 85
    %s44 = sshrl.u32 %s43, 1
    %s45 = sor.u32 %s43, %s44
    %s46 = sand.u32 51, %s45
    %s47 = sshrl.u32 %s46, 2
    %s48 = sor.u32 %s46, %s47
    %s49 = sand.u32 15, %s48
    %v50 = vld [vmem:[%s40] sm:%s49]
    %v51 = vunpack.c.l.bf16 %v50
    %v52 = vunpack.c.h.bf16 %v50
    %v53 = vlaneseq
    %v54 = vand.u32 %v53, 127
    %vm56 = vcmp.lt.s32.totalorder %v54, 60
    %v57 = vsel %vm56, %v51, %v10
    %s58 = scalar_lea.vmem [#allocation7], 4
    %v59 = vpack.c.bf16 0.0, %v57
    %61 = vst [vmem:[%s58] sm:$0xf] %v59
    %s62 = scalar_lea.vmem %s2, 8
    %s64 = sor.u32 255, 127
    %s65 = sand.u32 %s64, 85
    %s66 = sshrl.u32 %s65, 1
    %s67 = sor.u32 %s65, %s66
    %s68 = sand.u32 51, %s67
    %s69 = sshrl.u32 %s68, 2
    %s70 = sor.u32 %s68, %s69
    %s71 = sand.u32 15, %s70
    %v72 = vld [vmem:[%s62] sm:%s71]
    %v73 = vunpack.c.l.bf16 %v72
    %v74 = vunpack.c.h.bf16 %v72
    %v75 = vlaneseq
    %v76 = vand.u32 %v75, 127
    %vm78 = vcmp.lt.s32.totalorder %v76, 60
    %v79 = vsel %vm78, %v73, %v10
    %s80 = scalar_lea.vmem [#allocation7], 8
    %v81 = vpack.c.bf16 0.0, %v79
    %83 = vst [vmem:[%s80] sm:$0xf] %v81
    %s84 = scalar_lea.vmem %s2, 12
    %s86 = sor.u32 255, 127
    %s87 = sand.u32 %s86, 85
    %s88 = sshrl.u32 %s87, 1
    %s89 = sor.u32 %s87, %s88
    %s90 = sand.u32 51, %s89
    %s91 = sshrl.u32 %s90, 2
    %s92 = sor.u32 %s90, %s91
    %s93 = sand.u32 15, %s92
    %v94 = vld [vmem:[%s84] sm:%s93]
    %v95 = vunpack.c.l.bf16 %v94
    %v96 = vunpack.c.h.bf16 %v94
    %v97 = vlaneseq
    %v98 = vand.u32 %v97, 127
    %vm100 = vcmp.lt.s32.totalorder %v98, 60
    %v101 = vsel %vm100, %v95, %v10
    %s102 = scalar_lea.vmem [#allocation7], 12
    %v103 = vpack.c.bf16 0.0, %v101
    %105 = vst [vmem:[%s102] sm:$0xf] %v103
    %s106 = scalar_lea.vmem %s2, 16
    %s108 = sor.u32 255, 127
    %s109 = sand.u32 %s108, 85
    %s110 = sshrl.u32 %s109, 1
    %s111 = sor.u32 %s109, %s110
    %s112 = sand.u32 51, %s111
    %s113 = sshrl.u32 %s112, 2
    %s114 = sor.u32 %s112, %s113
    %s115 = sand.u32 15, %s114
    %v116 = vld [vmem:[%s106] sm:%s115]
    %v117 = vunpack.c.l.bf16 %v116
    %v118 = vunpack.c.h.bf16 %v116
    %v119 = vlaneseq
    %v120 = vand.u32 %v119, 127
    %vm122 = vcmp.lt.s32.totalorder %v120, 60
    %v123 = vsel %vm122, %v117, %v10
    %s124 = scalar_lea.vmem [#allocation7], 16
    %v125 = vpack.c.bf16 0.0, %v123
    %127 = vst [vmem:[%s124] sm:$0xf] %v125
    %s128 = scalar_lea.vmem %s2, 20
    %s130 = sor.u32 255, 127
    %s131 = sand.u32 %s130, 85
    %s132 = sshrl.u32 %s131, 1
    %s133 = sor.u32 %s131, %s132
    %s134 = sand.u32 51, %s133
    %s135 = sshrl.u32 %s134, 2
    %s136 = sor.u32 %s134, %s135
    %s137 = sand.u32 15, %s136
    %v138 = vld [vmem:[%s128] sm:%s137]
    %v139 = vunpack.c.l.bf16 %v138
    %v140 = vunpack.c.h.bf16 %v138
    %v141 = vlaneseq
    %v142 = vand.u32 %v141, 127
    %vm144 = vcmp.lt.s32.totalorder %v142, 60
    %v145 = vsel %vm144, %v139, %v10
    %s146 = scalar_lea.vmem [#allocation7], 20
    %v147 = vpack.c.bf16 0.0, %v145
    %149 = vst [vmem:[%s146] sm:$0xf] %v147
    %v151 = vld [vmem:[%s0] sm:$0xf]
    %v152 = vld [vmem:[%s0 + $0x4] sm:$0xf]
    %v153 = vld [vmem:[%s0 + $0x8] sm:$0xf]
    %v154 = vld [vmem:[%s0 + $0xc] sm:$0xf]
    %v155 = vld [vmem:[%s0 + $0x10] sm:$0xf]
    %v156 = vld [vmem:[%s0 + $0x14] sm:$0xf]
    %v157 = vld [vmem:[%s0 + $0x18] sm:$0xf]
    %v158 = vld [vmem:[%s0 + $0x1c] sm:$0xf]
    %v159 = vld [vmem:[%s0 + $0x20] sm:$0xf]
    %v160 = vld [vmem:[%s0 + $0x24] sm:$0xf]
    %v161 = vld [vmem:[%s0 + $0x28] sm:$0xf]
    %v162 = vld [vmem:[%s0 + $0x2c] sm:$0xf]
    %v163 = vld [vmem:[%s0 + $0x30] sm:$0xf]
    %v164 = vld [vmem:[%s0 + $0x34] sm:$0xf]
    %v165 = vld [vmem:[%s0 + $0x38] sm:$0xf]
    %v166 = vld [vmem:[%s0 + $0x3c] sm:$0xf]
    %v167 = vld [vmem:[#allocation7] sm:$0xf]
    %v168 = vld [vmem:[#allocation7 + $0x4] sm:$0xf]
    %v169 = vld [vmem:[#allocation7 + $0x8] sm:$0xf]
    %v170 = vld [vmem:[#allocation7 + $0xc] sm:$0xf]
    %v171 = vld [vmem:[#allocation7 + $0x10] sm:$0xf]
    %v172 = vld [vmem:[#allocation7 + $0x14] sm:$0xf]
    %v173 = vld [vmem:[%s1] sm:$0xff]
    %v174 = vld [vmem:[%s1 + $0x8] sm:$0xff]
    %v175 = vld [vmem:[%s1 + $0x10] sm:$0xff]
    %v176 = vld [vmem:[%s1 + $0x18] sm:$0xff]
    %v177 = vld [vmem:[%s1 + $0x20] sm:$0xff]
    %v178 = vld [vmem:[%s1 + $0x28] sm:$0xff]
    %v179 = vld [vmem:[%s1 + $0x30] sm:$0xff]
    %v180 = vld [vmem:[%s1 + $0x38] sm:$0xff]
    %v181 = vld [vmem:[%s1 + $0x40] sm:$0xff]
    %v182 = vld [vmem:[%s1 + $0x48] sm:$0xff]
    %v183 = vld [vmem:[%s1 + $0x50] sm:$0xff]
    %v184 = vld [vmem:[%s1 + $0x58] sm:$0xff]
    %v185 = vld [vmem:[%s1 + $0x60] sm:$0xff]
    %v186 = vld [vmem:[%s1 + $0x68] sm:$0xff]
    %v187 = vld [vmem:[%s1 + $0x70] sm:$0xff]
    %v188 = vld [vmem:[%s1 + $0x78] sm:$0xff]
    %190 = vset.pattern.permute.xlu0 0
    %191 = vperm.xlu0 %190, %v173
    %v192 = vpop.permute.xlu0 %191
    %195 = vset.pattern.permute.xlu0 0
    %196 = vperm.xlu0 %195, %v174
    %v197 = vpop.permute.xlu0 %196
    %200 = vset.pattern.permute.xlu0 0
    %201 = vperm.xlu0 %200, %v175
    %v202 = vpop.permute.xlu0 %201
    %205 = vset.pattern.permute.xlu0 0
    %206 = vperm.xlu0 %205, %v176
    %v207 = vpop.permute.xlu0 %206
    %210 = vset.pattern.permute.xlu0 0
    %211 = vperm.xlu0 %210, %v177
    %v212 = vpop.permute.xlu0 %211
    %215 = vset.pattern.permute.xlu0 0
    %216 = vperm.xlu0 %215, %v178
    %v217 = vpop.permute.xlu0 %216
    %220 = vset.pattern.permute.xlu0 0
    %221 = vperm.xlu0 %220, %v179
    %v222 = vpop.permute.xlu0 %221
    %225 = vset.pattern.permute.xlu0 0
    %226 = vperm.xlu0 %225, %v180
    %v227 = vpop.permute.xlu0 %226
    %230 = vset.pattern.permute.xlu0 0
    %231 = vperm.xlu0 %230, %v181
    %v232 = vpop.permute.xlu0 %231
    %235 = vset.pattern.permute.xlu0 0
    %236 = vperm.xlu0 %235, %v182
    %v237 = vpop.permute.xlu0 %236
    %240 = vset.pattern.permute.xlu0 0
    %241 = vperm.xlu0 %240, %v183
    %v242 = vpop.permute.xlu0 %241
    %245 = vset.pattern.permute.xlu0 0
    %246 = vperm.xlu0 %245, %v184
    %v247 = vpop.permute.xlu0 %246
    %250 = vset.pattern.permute.xlu0 0
    %251 = vperm.xlu0 %250, %v185
    %v252 = vpop.permute.xlu0 %251
    %255 = vset.pattern.permute.xlu0 0
    %256 = vperm.xlu0 %255, %v186
    %v257 = vpop.permute.xlu0 %256
    %260 = vset.pattern.permute.xlu0 0
    %261 = vperm.xlu0 %260, %v187
    %v262 = vpop.permute.xlu0 %261
    %265 = vset.pattern.permute.xlu0 0
    %266 = vperm.xlu0 %265, %v188
    %v267 = vpop.permute.xlu0 %266
    %v285 = vunpack.c.l.b16 %v151
    %v286 = vunpack.c.l.b16 %v152
    %v287 = vunpack.c.l.b16 %v153
    %v288 = vunpack.c.l.b16 %v154
    %v289 = vunpack.c.l.b16 %v155
    %v290 = vunpack.c.l.b16 %v156
    %v291 = vunpack.c.l.b16 %v157
    %v292 = vunpack.c.l.b16 %v158
    %v293 = vunpack.c.l.b16 %v159
    %v294 = vunpack.c.l.b16 %v160
    %v295 = vunpack.c.l.b16 %v161
    %v296 = vunpack.c.l.b16 %v162
    %v297 = vunpack.c.l.b16 %v163
    %v298 = vunpack.c.l.b16 %v164
    %v299 = vunpack.c.l.b16 %v165
    %v300 = vunpack.c.l.b16 %v166
    %v301 = vpack.c.b16 %v286, %v285
    %v302 = vpack.c.b16 %v288, %v287
    %v303 = vpack.c.b16 %v290, %v289
    %v304 = vpack.c.b16 %v292, %v291
    %v305 = vpack.c.b16 %v294, %v293
    %v306 = vpack.c.b16 %v296, %v295
    %v307 = vpack.c.b16 %v298, %v297
    %v308 = vpack.c.b16 %v300, %v299
    %v315 = vunpack.c.l.b16 %v167
    %v316 = vunpack.c.l.b16 %v168
    %v317 = vunpack.c.l.b16 %v169
    %v318 = vunpack.c.l.b16 %v170
    %v319 = vunpack.c.l.b16 %v171
    %v320 = vunpack.c.l.b16 %v172
    %v321 = vpack.c.b16 %v316, %v315
    %v322 = vpack.c.b16 %v318, %v317
    %v323 = vpack.c.b16 %v320, %v319
    %vm327 = vcmask 392192
    %v329 = vsel %vm327, %v301, 0
    %v332 = vsel %vm327, %v302, 0
    %v335 = vsel %vm327, %v303, 0
    %v338 = vsel %vm327, %v304, 0
    %v341 = vsel %vm327, %v305, 0
    %v344 = vsel %vm327, %v306, 0
    %v347 = vsel %vm327, %v307, 0
    %v350 = vsel %vm327, %v308, 0
    %352 = vmatprep.subr.bf16.mxu0 0
    %353 = vmatpush1.bf16.msra.mxu0 %v321
    %354 = vmatprep.subr.bf16.mxu0 0
    %355 = vmatpush1.bf16.msra.mxu0 %v322
    %356 = vmatprep.subr.bf16.mxu0 0
    %357 = vmatpush1.bf16.msra.mxu0 %v323
    %358 = vmatprep.subr.bf16.mxu0 0
    %359 = vmatpush1.bf16.msra.mxu0 0
    %360 = vmatprep.subr.bf16.mxu0 0
    %361 = vmatpush1.bf16.msra.mxu0 0
    %362 = vmatprep.subr.bf16.mxu0 0
    %363 = vmatpush1.bf16.msra.mxu0 0
    %364 = vmatprep.subr.bf16.mxu0 0
    %365 = vmatpush1.bf16.msra.mxu0 0
    %366 = vmatprep.subr.bf16.mxu0 0
    %367 = vmatpush1.bf16.msra.mxu0 0
    %368 = vmatprep.subr.bf16.mxu0 0
    %369 = vmatpush1.bf16.msra.mxu0 0
    %370 = vmatprep.subr.bf16.mxu0 0
    %371 = vmatpush1.bf16.msra.mxu0 0
    %372 = vmatprep.subr.bf16.mxu0 0
    %373 = vmatpush1.bf16.msra.mxu0 0
    %374 = vmatprep.subr.bf16.mxu0 0
    %375 = vmatpush1.bf16.msra.mxu0 0
    %376 = vmatprep.subr.bf16.mxu0 0
    %377 = vmatpush1.bf16.msra.mxu0 0
    %378 = vmatprep.subr.bf16.mxu0 0
    %379 = vmatpush1.bf16.msra.mxu0 0
    %380 = vmatprep.subr.bf16.mxu0 0
    %381 = vmatpush1.bf16.msra.mxu0 0
    %382 = vmatprep.subr.bf16.mxu0 0
    %383 = vmatpush1.bf16.msra.mxu0 0
    %384 = vmatprep.mubr.bf16.mxu0 0
    %385 = vmatmul.mubr.bf16.gmra.mrb[0].mxu0 %v329
    %v386 = vpop.f32.mrb[0].mxu0
    %v387 = vadd.f32 %v192, %v386
    %v388 = vpop.f32.mrb[0].mxu0
    %v389 = vpop.f32.mrb[0].mxu0
    %v390 = vadd.f32 %v197, %v389
    %v391 = vpop.f32.mrb[0].mxu0
    %392 = vmatprep.mubr.bf16.mxu0 0
    %393 = vmatmul.mubr.bf16.gmra.mrb[0].mxu0 %v332
    %v394 = vpop.f32.mrb[0].mxu0
    %v395 = vadd.f32 %v202, %v394
    %v396 = vpop.f32.mrb[0].mxu0
    %v397 = vpop.f32.mrb[0].mxu0
    %v398 = vadd.f32 %v207, %v397
    %v399 = vpop.f32.mrb[0].mxu0
    %400 = vmatprep.mubr.bf16.mxu0 0
    %401 = vmatmul.mubr.bf16.gmra.mrb[0].mxu0 %v335
    %v402 = vpop.f32.mrb[0].mxu0
    %v403 = vadd.f32 %v212, %v402
    %v404 = vpop.f32.mrb[0].mxu0
    %v405 = vpop.f32.mrb[0].mxu0
    %v406 = vadd.f32 %v217, %v405
    %v407 = vpop.f32.mrb[0].mxu0
    %408 = vmatprep.mubr.bf16.mxu0 0
    %409 = vmatmul.mubr.bf16.gmra.mrb[0].mxu0 %v338
    %v410 = vpop.f32.mrb[0].mxu0
    %v411 = vadd.f32 %v222, %v410
    %v412 = vpop.f32.mrb[0].mxu0
    %v413 = vpop.f32.mrb[0].mxu0
    %v414 = vadd.f32 %v227, %v413
    %v415 = vpop.f32.mrb[0].mxu0
    %416 = vmatprep.mubr.bf16.mxu0 0
    %417 = vmatmul.mubr.bf16.gmra.mrb[0].mxu0 %v341
    %v418 = vpop.f32.mrb[0].mxu0
    %v419 = vadd.f32 %v232, %v418
    %v420 = vpop.f32.mrb[0].mxu0
    %v421 = vpop.f32.mrb[0].mxu0
    %v422 = vadd.f32 %v237, %v421
    %v423 = vpop.f32.mrb[0].mxu0
    %424 = vmatprep.mubr.bf16.mxu0 0
    %425 = vmatmul.mubr.bf16.gmra.mrb[0].mxu0 %v344
    %v426 = vpop.f32.mrb[0].mxu0
    %v427 = vadd.f32 %v242, %v426
    %v428 = vpop.f32.mrb[0].mxu0
    %v429 = vpop.f32.mrb[0].mxu0
    %v430 = vadd.f32 %v247, %v429
    %v431 = vpop.f32.mrb[0].mxu0
    %432 = vmatprep.mubr.bf16.mxu0 0
    %433 = vmatmul.mubr.bf16.gmra.mrb[0].mxu0 %v347
    %v434 = vpop.f32.mrb[0].mxu0
    %v435 = vadd.f32 %v252, %v434
    %v436 = vpop.f32.mrb[0].mxu0
    %v437 = vpop.f32.mrb[0].mxu0
    %v438 = vadd.f32 %v257, %v437
    %v439 = vpop.f32.mrb[0].mxu0
    %440 = vmatprep.mubr.bf16.mxu0 0
    %441 = vmatmul.mubr.bf16.gmra.mrb[0].mxu0 %v350
    %v442 = vpop.f32.mrb[0].mxu0
    %v443 = vadd.f32 %v262, %v442
    %v444 = vpop.f32.mrb[0].mxu0
    %v445 = vpop.f32.mrb[0].mxu0
    %v446 = vadd.f32 %v267, %v445
    %v447 = vpop.f32.mrb[0].mxu0
    %448 = vdwg.mxu0
    %v449 = vmax.f32 %v387, 0.0
    %v450 = vmax.f32 %v390, 0.0
    %v451 = vmax.f32 %v395, 0.0
    %v452 = vmax.f32 %v398, 0.0
    %v453 = vmax.f32 %v403, 0.0
    %v454 = vmax.f32 %v406, 0.0
    %v455 = vmax.f32 %v411, 0.0
    %v456 = vmax.f32 %v414, 0.0
    %v457 = vmax.f32 %v419, 0.0
    %v458 = vmax.f32 %v422, 0.0
    %v459 = vmax.f32 %v427, 0.0
    %v460 = vmax.f32 %v430, 0.0
    %v461 = vmax.f32 %v435, 0.0
    %v462 = vmax.f32 %v438, 0.0
    %v463 = vmax.f32 %v443, 0.0
    %v464 = vmax.f32 %v446, 0.0
    %v465 = vpack.c.bf16 %v450, %v449
    %v466 = vpack.c.bf16 %v452, %v451
    %v467 = vpack.c.bf16 %v454, %v453
    %v468 = vpack.c.bf16 %v456, %v455
    %v469 = vpack.c.bf16 %v458, %v457
    %v470 = vpack.c.bf16 %v460, %v459
    %v471 = vpack.c.bf16 %v462, %v461
    %v472 = vpack.c.bf16 %v464, %v463
    %v481 = vunpack.c.l.b16 %v465
    %v482 = vunpack.c.h.b16 %v465
    %v483 = vunpack.c.l.b16 %v466
    %v484 = vunpack.c.h.b16 %v466
    %v485 = vunpack.c.l.b16 %v467
    %v486 = vunpack.c.h.b16 %v467
    %v487 = vunpack.c.l.b16 %v468
    %v488 = vunpack.c.h.b16 %v468
    %v489 = vunpack.c.l.b16 %v469
    %v490 = vunpack.c.h.b16 %v469
    %v491 = vunpack.c.l.b16 %v470
    %v492 = vunpack.c.h.b16 %v470
    %v493 = vunpack.c.l.b16 %v471
    %v494 = vunpack.c.h.b16 %v471
    %v495 = vunpack.c.l.b16 %v472
    %v496 = vunpack.c.h.b16 %v472
    %v497 = vpack.c.b16 %v481, %v481
    %v498 = vpack.c.b16 %v482, %v482
    %v499 = vpack.c.b16 %v483, %v483
    %v500 = vpack.c.b16 %v484, %v484
    %v501 = vpack.c.b16 %v485, %v485
    %v502 = vpack.c.b16 %v486, %v486
    %v503 = vpack.c.b16 %v487, %v487
    %v504 = vpack.c.b16 %v488, %v488
    %v505 = vpack.c.b16 %v489, %v489
    %v506 = vpack.c.b16 %v490, %v490
    %v507 = vpack.c.b16 %v491, %v491
    %v508 = vpack.c.b16 %v492, %v492
    %v509 = vpack.c.b16 %v493, %v493
    %v510 = vpack.c.b16 %v494, %v494
    %v511 = vpack.c.b16 %v495, %v495
    %v512 = vpack.c.b16 %v496, %v496
    %529 = vst [vmem:[%s4] sm:$0xf] %v497
    %530 = vst [vmem:[%s4 + $0x4] sm:$0xf] %v498
    %531 = vst [vmem:[%s4 + $0x8] sm:$0xf] %v499
    %532 = vst [vmem:[%s4 + $0xc] sm:$0xf] %v500
    %533 = vst [vmem:[%s4 + $0x10] sm:$0xf] %v501
    %534 = vst [vmem:[%s4 + $0x14] sm:$0xf] %v502
    %535 = vst [vmem:[%s4 + $0x18] sm:$0xf] %v503
    %536 = vst [vmem:[%s4 + $0x1c] sm:$0xf] %v504
    %537 = vst [vmem:[%s4 + $0x20] sm:$0xf] %v505
    %538 = vst [vmem:[%s4 + $0x24] sm:$0xf] %v506
    %539 = vst [vmem:[%s4 + $0x28] sm:$0xf] %v507
    %540 = vst [vmem:[%s4 + $0x2c] sm:$0xf] %v508
    %541 = vst [vmem:[%s4 + $0x30] sm:$0xf] %v509
    %542 = vst [vmem:[%s4 + $0x34] sm:$0xf] %v510
    %543 = vst [vmem:[%s4 + $0x38] sm:$0xf] %v511
    %544 = vst [vmem:[%s4 + $0x3c] sm:$0xf] %v512
    // Predicated region
    $region14: #{conv_block_forward.2} parent=1 // pred_check
      _
    $region15: #{conv_block_forward.2} parent=1 // pred_check_branch
      %546 = sbr.rel (0) target = $region17
    $region16: #{conv_block_forward.2} parent=1 // pred_region
      _
    $region17: #{conv_block_forward.2} parent=1 // pred_fallthru
      _
    // Predicated region
    $region18: #{conv_block_forward.2} parent=1 // pred_check
      _
    $region19: #{conv_block_forward.2} parent=1 // pred_check_branch
      %548 = sbr.rel (0) target = $region21
    $region20: #{conv_block_forward.2} parent=1 // pred_region
      _
    $region21: #{conv_block_forward.2} parent=1 // pred_fallthru
      _

</llo_original>
